<compile_context>
chip_gen: v6e
topology: v6e:2x2x1
jax: 0.10.0
libtpu: 0.0.40
codegen_flags: <defaults>
</compile_context>

<pallas_src>
import math
from functools import partial

import jax
import jax.numpy as jnp
import numpy as np
from jax.experimental import pallas as pl
from jax.experimental.pallas import tpu as pltpu


def mha_kernel(x_ref, wqkv_ref, bqkv_ref,
               qexp_ref, kexp_ref, vexp_ref, hsum_ref, wtile_ref, fold_ref,
               wo_ref, bo_ref,
               o_ref, *, batch, seq, depth):
    """Fused MHA forward, single grid step, no scratch.

    Lane-index convention for the expanded 64-lane axis: col = h*dp*dp + i*dp + j.
    """
    scale = np.float32(1.0 / math.sqrt(depth))

    # ---- fused Q/K/V projection: [q|k|v] (N,3D) @ blockdiag(WqT,WkT,WvT) ----
    qkv = jnp.dot(x_ref[...], wqkv_ref[...], preferred_element_type=jnp.float32)
    qkv = qkv + bqkv_ref[...]                      # bias broadcast, once

    # ---- scores[b,s,i,j] = scale * sum_h Q[n,h*dp+i] * K[n,h*dp+j] ----
    # QE[n, h*dp*dp+i*dp+j] = Q[n, h*dp+i]; KE[...] = K[n, h*dp+j]   (MXU expansions)
    qe = jnp.dot(qkv, qexp_ref[...], preferred_element_type=jnp.float32)   # (N, H*dp*dp)
    ke = jnp.dot(qkv, kexp_ref[...], preferred_element_type=jnp.float32)   # (N, H*dp*dp)
    scores = scale * jnp.dot(qe * ke, hsum_ref[...],
                             preferred_element_type=jnp.float32)           # (N, dp*dp)

    # ---- softmax over the *batch* axis (torch.softmax(scores, dim=0)) ----
    # TODO(synk): optional `mask` argument path not implemented (reference uses mask=None).
    rows = [scores[b * seq:(b + 1) * seq, :] for b in range(batch)]  # aligned sublane slices
    m = rows[0]
    for b in range(1, batch):
        m = jnp.maximum(m, rows[b])
    exps = [jnp.exp(r - m) for r in rows]
    den = exps[0]
    for b in range(1, batch):
        den = den + exps[b]
    inv = pl.reciprocal(den, approx=True)                       # EUP slot, ~free
    w = jnp.concatenate([e * inv for e in exps], axis=0)        # (N, dp*dp)

    # ---- attention_output with transpose(-1,-2).reshape folded in ----
    #   flat[n, h*dp+i] = sum_j w[n, i*dp+j] * V[n, h*dp+j]
    we = jnp.dot(w, wtile_ref[...], preferred_element_type=jnp.float32)    # tile w over heads
    ve = jnp.dot(qkv, vexp_ref[...], preferred_element_type=jnp.float32)   # expand V over i
    flat = jnp.dot(we * ve, fold_ref[...], preferred_element_type=jnp.float32)  # (N, D)

    # ---- output projection + sigmoid ----
    y = jnp.dot(flat, wo_ref[...], preferred_element_type=jnp.float32) + bo_ref[...]
    o_ref[...] = jax.nn.sigmoid(y)


def _expansion_constants(num_heads, depth):
    """Constant 0/1 matrices encoding split_heads / per-row outer products / refold."""
    D = num_heads * depth
    M = depth * depth
    HM = num_heads * M
    qexp = np.zeros((3 * D, HM), np.float32)
    kexp = np.zeros((3 * D, HM), np.float32)
    vexp = np.zeros((3 * D, HM), np.float32)
    hsum = np.zeros((HM, M), np.float32)
    wtile = np.zeros((M, HM), np.float32)
    fold = np.zeros((HM, D), np.float32)
    for h in range(num_heads):
        for i in range(depth):
            for j in range(depth):
                col = h * M + i * depth + j
                qexp[0 * D + h * depth + i, col] = 1.0
                kexp[1 * D + h * depth + j, col] = 1.0
                vexp[2 * D + h * depth + j, col] = 1.0
                hsum[col, i * depth + j] = 1.0
                wtile[i * depth + j, col] = 1.0
                fold[col, h * depth + i] = 1.0
    return qexp, kexp, vexp, hsum, wtile, fold


def multihead_attention(query, key, value, params, num_heads):
    """Wrapper: layout plumbing in plain JAX/numpy, compute in one Pallas call."""
    B, S, D = query.shape
    depth = D // num_heads
    assert D == num_heads * depth
    assert D == S, "reference module's final reshape requires in_dim == seq_len"
    wq, bq, wk, bk, wv, bv, wo, bo = params
    out_dim = wo.shape[0]
    N = B * S

    # fused projection: block-diag(Wq^T, Wk^T, Wv^T) and concatenated bias row
    wqkv = jnp.zeros((3 * D, 3 * D), jnp.float32)
    wqkv = (wqkv.at[0:D, 0:D].set(wq.T)
                 .at[D:2 * D, D:2 * D].set(wk.T)
                 .at[2 * D:3 * D, 2 * D:3 * D].set(wv.T))
    bqkv = jnp.concatenate([bq, bk, bv]).reshape(1, 3 * D)
    x_cat = jnp.concatenate(
        [query.reshape(N, D), key.reshape(N, D), value.reshape(N, D)], axis=1)

    qexp, kexp, vexp, hsum, wtile, fold = _expansion_constants(num_heads, depth)

    args = (x_cat, wqkv, bqkv,
            jnp.asarray(qexp), jnp.asarray(kexp), jnp.asarray(vexp),
            jnp.asarray(hsum), jnp.asarray(wtile), jnp.asarray(fold),
            wo.T, bo.reshape(1, -1))

    def full(shape):
        return pl.BlockSpec(shape, lambda i, n=len(shape): (0,) * n)

    kernel = partial(mha_kernel, batch=B, seq=S, depth=depth)
    out = pl.pallas_call(
        kernel,
        out_shape=jax.ShapeDtypeStruct((N, out_dim), jnp.float32),
        grid=(1,),
        in_specs=[full(a.shape) for a in args],
        out_specs=full((N, out_dim)),
        compiler_params=pltpu.CompilerParams(
            dimension_semantics=("arbitrary",)),
    )(*args)
    return out.reshape(B, S, out_dim)


def reference(query, key, value, params, num_heads):
    """Pure-JAX mirror of the PyTorch forward (including softmax over dim=0)."""
    wq, bq, wk, bk, wv, bv, wo, bo = params
    B, S, D = query.shape
    depth = D // num_heads

    def lin(x, w, b):
        return x @ w.T + b

    def split(x):  # (B,S,D) -> (B,S,depth,H)
        return x.reshape(B, S, num_heads, depth).swapaxes(-1, -2)

    Q, K, V = lin(query, wq, bq), lin(key, wk, bk), lin(value, wv, bv)
    Qs, Ks, Vs = split(Q), split(K), split(V)
    scores = jnp.matmul(Qs, Ks.swapaxes(-1, -2)) / jnp.sqrt(jnp.float32(depth))
    w = jax.nn.softmax(scores, axis=0)               # softmax over the batch dim
    ao = jnp.matmul(w, Vs)                           # (B,S,depth,H)
    ao = ao.swapaxes(-1, -2).reshape(B, S, S)        # valid because D == S
    return jax.nn.sigmoid(lin(ao, wo, bo))


if __name__ == "__main__":
    B, S, in_dim, out_dim, num_heads = 2, 16, 16, 8, 4

    key0 = jax.random.PRNGKey(0)
    ks = jax.random.split(key0, 11)

    def mk(k, shape, scale=0.1):
        return scale * jax.random.normal(k, shape, dtype=jnp.float32)

    # Parameter shapes mirror nn.Linear: weight (out, in), bias (out,)
    wq, bq = mk(ks[0], (in_dim, in_dim)), mk(ks[1], (in_dim,))
    wk, bk = mk(ks[2], (in_dim, in_dim)), mk(ks[3], (in_dim,))
    wv, bv = mk(ks[4], (in_dim, in_dim)), mk(ks[5], (in_dim,))
    wo, bo = mk(ks[6], (out_dim, in_dim)), mk(ks[7], (out_dim,))
    params = (wq, bq, wk, bk, wv, bv, wo, bo)

    query = jax.random.normal(ks[8], (B, S, in_dim), dtype=jnp.float32)
    key_t = jax.random.normal(ks[9], (B, S, in_dim), dtype=jnp.float32)
    value = jax.random.normal(ks[10], (B, S, in_dim), dtype=jnp.float32)

    out = multihead_attention(query, key_t, value, params, num_heads)
    out = jax.block_until_ready(out)

    ref = reference(query, key_t, value, params, num_heads)
    assert out.shape == (B, S, out_dim)
    assert bool(jnp.all(jnp.isfinite(out)))
    assert bool(jnp.allclose(out, ref, atol=2e-2, rtol=2e-2))
    print("KERNEL_OK")
</pallas_src>

<mosaic_0001>
module attributes {stable_mosaic.version = 11 : i64} {
  func.func @mha_kernel(%arg0: i32, %arg1: memref<32x48xf32, #tpu.memory_space<vmem>>, %arg2: memref<48x48xf32, #tpu.memory_space<vmem>>, %arg3: memref<1x48xf32, #tpu.memory_space<vmem>>, %arg4: memref<48x64xf32, #tpu.memory_space<vmem>>, %arg5: memref<48x64xf32, #tpu.memory_space<vmem>>, %arg6: memref<48x64xf32, #tpu.memory_space<vmem>>, %arg7: memref<64x16xf32, #tpu.memory_space<vmem>>, %arg8: memref<16x64xf32, #tpu.memory_space<vmem>>, %arg9: memref<64x16xf32, #tpu.memory_space<vmem>>, %arg10: memref<16x8xf32, #tpu.memory_space<vmem>>, %arg11: memref<1x8xf32, #tpu.memory_space<vmem>>, %arg12: memref<32x8xf32, #tpu.memory_space<vmem>>) attributes {dimension_semantics = [#tpu.dimension_semantics<arbitrary>], iteration_bounds = array<i64: 1>, scalar_prefetch = 0 : i64, scratch_operands = 0 : i64, tpu.core_type = #tpu.core_type<tc>, window_params = [{pipeline_mode = #tpu.pipeline_mode<synchronous>, transform_indices = @transform_0, window_bounds = array<i64: 32, 48>}, {pipeline_mode = #tpu.pipeline_mode<synchronous>, transform_indices = @transform_1, window_bounds = array<i64: 48, 48>}, {pipeline_mode = #tpu.pipeline_mode<synchronous>, transform_indices = @transform_2, window_bounds = array<i64: 1, 48>}, {pipeline_mode = #tpu.pipeline_mode<synchronous>, transform_indices = @transform_3, window_bounds = array<i64: 48, 64>}, {pipeline_mode = #tpu.pipeline_mode<synchronous>, transform_indices = @transform_4, window_bounds = array<i64: 48, 64>}, {pipeline_mode = #tpu.pipeline_mode<synchronous>, transform_indices = @transform_5, window_bounds = array<i64: 48, 64>}, {pipeline_mode = #tpu.pipeline_mode<synchronous>, transform_indices = @transform_6, window_bounds = array<i64: 64, 16>}, {pipeline_mode = #tpu.pipeline_mode<synchronous>, transform_indices = @transform_7, window_bounds = array<i64: 16, 64>}, {pipeline_mode = #tpu.pipeline_mode<synchronous>, transform_indices = @transform_8, window_bounds = array<i64: 64, 16>}, {pipeline_mode = #tpu.pipeline_mode<synchronous>, transform_indices = @transform_9, window_bounds = array<i64: 16, 8>}, {pipeline_mode = #tpu.pipeline_mode<synchronous>, transform_indices = @transform_10, window_bounds = array<i64: 1, 8>}, {pipeline_mode = #tpu.pipeline_mode<synchronous>, transform_indices = @transform_11, window_bounds = array<i64: 32, 8>}]} {
    %c0 = arith.constant 0 : index
    %c0_0 = arith.constant 0 : index
    %0 = vector.load %arg1[%c0, %c0_0] : memref<32x48xf32, #tpu.memory_space<vmem>>, vector<32x48xf32>
    %c0_1 = arith.constant 0 : index
    %c0_2 = arith.constant 0 : index
    %1 = vector.load %arg2[%c0_1, %c0_2] : memref<48x48xf32, #tpu.memory_space<vmem>>, vector<48x48xf32>
    %cst = arith.constant dense<0.000000e+00> : vector<32x48xf32>
    %2 = tpu.matmul %0, %1, %cst {dimension_numbers = #tpu.dot_dimension_numbers<[1], [0], [0], [1], [0, 0, 1, 1], [], []>} : vector<32x48xf32>, vector<48x48xf32>, vector<32x48xf32> -> vector<32x48xf32>
    %c0_3 = arith.constant 0 : index
    %c0_4 = arith.constant 0 : index
    %3 = vector.load %arg3[%c0_3, %c0_4] : memref<1x48xf32, #tpu.memory_space<vmem>>, vector<1x48xf32>
    %4 = vector.broadcast %3 : vector<1x48xf32> to vector<32x48xf32>
    %5 = arith.addf %2, %4 : vector<32x48xf32>
    %c0_5 = arith.constant 0 : index
    %c0_6 = arith.constant 0 : index
    %6 = vector.load %arg4[%c0_5, %c0_6] : memref<48x64xf32, #tpu.memory_space<vmem>>, vector<48x64xf32>
    %cst_7 = arith.constant dense<0.000000e+00> : vector<32x64xf32>
    %7 = tpu.matmul %5, %6, %cst_7 {dimension_numbers = #tpu.dot_dimension_numbers<[1], [0], [0], [1], [0, 0, 1, 1], [], []>} : vector<32x48xf32>, vector<48x64xf32>, vector<32x64xf32> -> vector<32x64xf32>
    %c0_8 = arith.constant 0 : index
    %c0_9 = arith.constant 0 : index
    %8 = vector.load %arg5[%c0_8, %c0_9] : memref<48x64xf32, #tpu.memory_space<vmem>>, vector<48x64xf32>
    %cst_10 = arith.constant dense<0.000000e+00> : vector<32x64xf32>
    %9 = tpu.matmul %5, %8, %cst_10 {dimension_numbers = #tpu.dot_dimension_numbers<[1], [0], [0], [1], [0, 0, 1, 1], [], []>} : vector<32x48xf32>, vector<48x64xf32>, vector<32x64xf32> -> vector<32x64xf32>
    %10 = arith.mulf %7, %9 : vector<32x64xf32>
    %c0_11 = arith.constant 0 : index
    %c0_12 = arith.constant 0 : index
    %11 = vector.load %arg7[%c0_11, %c0_12] : memref<64x16xf32, #tpu.memory_space<vmem>>, vector<64x16xf32>
    %cst_13 = arith.constant dense<0.000000e+00> : vector<32x16xf32>
    %12 = tpu.matmul %10, %11, %cst_13 {dimension_numbers = #tpu.dot_dimension_numbers<[1], [0], [0], [1], [0, 0, 1, 1], [], []>} : vector<32x64xf32>, vector<64x16xf32>, vector<32x16xf32> -> vector<32x16xf32>
    %cst_14 = arith.constant 5.000000e-01 : f32
    %13 = vector.broadcast %cst_14 : f32 to vector<32x16xf32>
    %14 = arith.mulf %13, %12 : vector<32x16xf32>
    %15 = vector.extract_strided_slice %14 {offsets = [0, 0], sizes = [16, 16], strides = [1, 1]} : vector<32x16xf32> to vector<16x16xf32>
    %16 = vector.extract_strided_slice %14 {offsets = [16, 0], sizes = [16, 16], strides = [1, 1]} : vector<32x16xf32> to vector<16x16xf32>
    %17 = arith.maximumf %15, %16 : vector<16x16xf32>
    %18 = arith.subf %15, %17 : vector<16x16xf32>
    %19 = math.exp %18 : vector<16x16xf32>
    %20 = arith.subf %16, %17 : vector<16x16xf32>
    %21 = math.exp %20 : vector<16x16xf32>
    %22 = arith.addf %19, %21 : vector<16x16xf32>
    %23 = tpu.reciprocal %22 {approx = true} : vector<16x16xf32> -> vector<16x16xf32>
    %24 = arith.mulf %19, %23 : vector<16x16xf32>
    %25 = arith.mulf %21, %23 : vector<16x16xf32>
    %26 = tpu.concatenate %24, %25 in 0 : vector<16x16xf32>, vector<16x16xf32> -> vector<32x16xf32>
    %c0_15 = arith.constant 0 : index
    %c0_16 = arith.constant 0 : index
    %27 = vector.load %arg8[%c0_15, %c0_16] : memref<16x64xf32, #tpu.memory_space<vmem>>, vector<16x64xf32>
    %cst_17 = arith.constant dense<0.000000e+00> : vector<32x64xf32>
    %28 = tpu.matmul %26, %27, %cst_17 {dimension_numbers = #tpu.dot_dimension_numbers<[1], [0], [0], [1], [0, 0, 1, 1], [], []>} : vector<32x16xf32>, vector<16x64xf32>, vector<32x64xf32> -> vector<32x64xf32>
    %c0_18 = arith.constant 0 : index
    %c0_19 = arith.constant 0 : index
    %29 = vector.load %arg6[%c0_18, %c0_19] : memref<48x64xf32, #tpu.memory_space<vmem>>, vector<48x64xf32>
    %cst_20 = arith.constant dense<0.000000e+00> : vector<32x64xf32>
    %30 = tpu.matmul %5, %29, %cst_20 {dimension_numbers = #tpu.dot_dimension_numbers<[1], [0], [0], [1], [0, 0, 1, 1], [], []>} : vector<32x48xf32>, vector<48x64xf32>, vector<32x64xf32> -> vector<32x64xf32>
    %31 = arith.mulf %28, %30 : vector<32x64xf32>
    %c0_21 = arith.constant 0 : index
    %c0_22 = arith.constant 0 : index
    %32 = vector.load %arg9[%c0_21, %c0_22] : memref<64x16xf32, #tpu.memory_space<vmem>>, vector<64x16xf32>
    %cst_23 = arith.constant dense<0.000000e+00> : vector<32x16xf32>
    %33 = tpu.matmul %31, %32, %cst_23 {dimension_numbers = #tpu.dot_dimension_numbers<[1], [0], [0], [1], [0, 0, 1, 1], [], []>} : vector<32x64xf32>, vector<64x16xf32>, vector<32x16xf32> -> vector<32x16xf32>
    %c0_24 = arith.constant 0 : index
    %c0_25 = arith.constant 0 : index
    %34 = vector.load %arg10[%c0_24, %c0_25] : memref<16x8xf32, #tpu.memory_space<vmem>>, vector<16x8xf32>
    %cst_26 = arith.constant dense<0.000000e+00> : vector<32x8xf32>
    %35 = tpu.matmul %33, %34, %cst_26 {dimension_numbers = #tpu.dot_dimension_numbers<[1], [0], [0], [1], [0, 0, 1, 1], [], []>} : vector<32x16xf32>, vector<16x8xf32>, vector<32x8xf32> -> vector<32x8xf32>
    %c0_27 = arith.constant 0 : index
    %c0_28 = arith.constant 0 : index
    %36 = vector.load %arg11[%c0_27, %c0_28] : memref<1x8xf32, #tpu.memory_space<vmem>>, vector<1x8xf32>
    %37 = vector.broadcast %36 : vector<1x8xf32> to vector<32x8xf32>
    %38 = arith.addf %35, %37 : vector<32x8xf32>
    %39 = arith.negf %38 : vector<32x8xf32>
    %40 = math.exp %39 : vector<32x8xf32>
    %cst_29 = arith.constant 1.000000e+00 : f32
    %41 = vector.broadcast %cst_29 : f32 to vector<32x8xf32>
    %42 = arith.addf %41, %40 : vector<32x8xf32>
    %43 = arith.divf %41, %42 : vector<32x8xf32>
    %c0_30 = arith.constant 0 : index
    %c0_31 = arith.constant 0 : index
    %44 = vector.load %arg12[%c0_30, %c0_31] : memref<32x8xf32, #tpu.memory_space<vmem>>, vector<32x8xf32>
    tpu.vector_store %arg12[%c0_30, %c0_31], %43 {strides = array<i32>} : memref<32x8xf32, #tpu.memory_space<vmem>>, vector<32x8xf32>,
    return
  }
  func.func @transform_0(%arg0: i32) -> (i32, i32) {
    %c0_i32 = arith.constant 0 : i32
    %c0_i32_0 = arith.constant 0 : i32
    %c0_i32_1 = arith.constant 0 : i32
    return %c0_i32, %c0_i32_0 : i32, i32
  }
  func.func @transform_1(%arg0: i32) -> (i32, i32) {
    %c0_i32 = arith.constant 0 : i32
    %c0_i32_0 = arith.constant 0 : i32
    %c0_i32_1 = arith.constant 0 : i32
    return %c0_i32, %c0_i32_0 : i32, i32
  }
  func.func @transform_2(%arg0: i32) -> (i32, i32) {
    %c0_i32 = arith.constant 0 : i32
    %c0_i32_0 = arith.constant 0 : i32
    %c0_i32_1 = arith.constant 0 : i32
    return %c0_i32, %c0_i32_0 : i32, i32
  }
  func.func @transform_3(%arg0: i32) -> (i32, i32) {
    %c0_i32 = arith.constant 0 : i32
    %c0_i32_0 = arith.constant 0 : i32
    %c0_i32_1 = arith.constant 0 : i32
    return %c0_i32, %c0_i32_0 : i32, i32
  }
  func.func @transform_4(%arg0: i32) -> (i32, i32) {
    %c0_i32 = arith.constant 0 : i32
    %c0_i32_0 = arith.constant 0 : i32
    %c0_i32_1 = arith.constant 0 : i32
    return %c0_i32, %c0_i32_0 : i32, i32
  }
  func.func @transform_5(%arg0: i32) -> (i32, i32) {
    %c0_i32 = arith.constant 0 : i32
    %c0_i32_0 = arith.constant 0 : i32
    %c0_i32_1 = arith.constant 0 : i32
    return %c0_i32, %c0_i32_0 : i32, i32
  }
  func.func @transform_6(%arg0: i32) -> (i32, i32) {
    %c0_i32 = arith.constant 0 : i32
    %c0_i32_0 = arith.constant 0 : i32
    %c0_i32_1 = arith.constant 0 : i32
    return %c0_i32, %c0_i32_0 : i32, i32
  }
  func.func @transform_7(%arg0: i32) -> (i32, i32) {
    %c0_i32 = arith.constant 0 : i32
    %c0_i32_0 = arith.constant 0 : i32
    %c0_i32_1 = arith.constant 0 : i32
    return %c0_i32, %c0_i32_0 : i32, i32
  }
  func.func @transform_8(%arg0: i32) -> (i32, i32) {
    %c0_i32 = arith.constant 0 : i32
    %c0_i32_0 = arith.constant 0 : i32
    %c0_i32_1 = arith.constant 0 : i32
    return %c0_i32, %c0_i32_0 : i32, i32
  }
  func.func @transform_9(%arg0: i32) -> (i32, i32) {
    %c0_i32 = arith.constant 0 : i32
    %c0_i32_0 = arith.constant 0 : i32
    %c0_i32_1 = arith.constant 0 : i32
    return %c0_i32, %c0_i32_0 : i32, i32
  }
  func.func @transform_10(%arg0: i32) -> (i32, i32) {
    %c0_i32 = arith.constant 0 : i32
    %c0_i32_0 = arith.constant 0 : i32
    %c0_i32_1 = arith.constant 0 : i32
    return %c0_i32, %c0_i32_0 : i32, i32
  }
  func.func @transform_11(%arg0: i32) -> (i32, i32) {
    %c0_i32 = arith.constant 0 : i32
    %c0_i32_0 = arith.constant 0 : i32
    %c0_i32_1 = arith.constant 0 : i32
    return %c0_i32, %c0_i32_0 : i32, i32
  }
}

</mosaic_0001>

<llo_original>
// kernel: tpu_custom_call.1
$region0: #{tpu_custom_call.1}
  #allocation0 [shape = 'u32[]', space=smem, size = 0x4, offset = 0x4, fixed_abs, tag = 'smem constant byte address 0x4 - core index']
  #allocation1 [shape = 'u32[144,128]{1,0:T(1,128)}', space=vmem, size = 0x12000, scoped, tag = 'internal scratch']
  %s0 = inlined_call_operand.vmem [shape: f32[32,48], index: 0, kind: input, shape index: {}]
  %s1 = inlined_call_operand.vmem [shape: f32[48,48], index: 1, kind: input, shape index: {}]
  %s2 = inlined_call_operand.hbm [shape: f32[1,48], index: 2, kind: input, shape index: {}]
  %s3 = inlined_call_operand.vmem [shape: f32[48,64], index: 3, kind: input, shape index: {}]
  %s4 = inlined_call_operand.vmem [shape: f32[48,64], index: 4, kind: input, shape index: {}]
  %s5 = inlined_call_operand.hbm [shape: f32[48,64], index: 5, kind: input, shape index: {}]
  %s6 = inlined_call_operand.vmem [shape: f32[64,16], index: 6, kind: input, shape index: {}]
  %s7 = inlined_call_operand.hbm [shape: f32[16,64], index: 7, kind: input, shape index: {}]
  %s8 = inlined_call_operand.vmem [shape: f32[64,16], index: 8, kind: input, shape index: {}]
  %s9 = inlined_call_operand.vmem [shape: f32[16,8], index: 9, kind: input, shape index: {}]
  %s10 = inlined_call_operand.vmem [shape: f32[1,8], index: 10, kind: input, shape index: {}]
  %s11 = inlined_call_operand.vmem [shape: f32[32,8], index: 11, kind: output, shape index: {}]
  %s12 = sld [smem:[#allocation0]]
  $region66: #{tpu_custom_call.1} parent=0
    _
  %s14 = ssub.s32 1, %s12
  %s15 = scalar_select 0, %s14, %s12
  $region1: #{tpu_custom_call.1} parent=0
    #allocation2 [shape = 'u8[512]{0}', space=vmem, size = 0x400, scoped, tag = 'input window, operand 2, single buffered']
    #allocation3 [shape = 's32[1]{0}', space=sflag, size = 0x4, scoped, tag = 'scoped memory for tpu_custom_call.1']
    #allocation4 [shape = 'u8[24576]{0}', space=vmem, size = 0x6000, scoped, tag = 'input window, operand 5, single buffered']
    #allocation5 [shape = 's32[1]{0}', space=sflag, size = 0x4, scoped, tag = 'scoped memory for tpu_custom_call.1']
    #allocation6 [shape = 'u8[8192]{0}', space=vmem, size = 0x2000, scoped, tag = 'input window, operand 7, single buffered']
    %16 = vsyncpa [#allocation3], 0
    %17 = vsyncpa [#allocation5], 0
    // Predicated region
    $region2: #{tpu_custom_call.1} parent=1 // pred_check
      _
    $region3: #{tpu_custom_call.1} parent=1 // pred_check_branch
      %19 = sbr.rel (0) target = $region5
    $region4: #{tpu_custom_call.1} parent=1 // pred_region
      _
    $region5: #{tpu_custom_call.1} parent=1 // pred_fallthru
      _
    // Predicated region
    $region6: #{tpu_custom_call.1} parent=1 // pred_check
      _
    $region7: #{tpu_custom_call.1} parent=1 // pred_check_branch
      %21 = sbr.rel (0) target = $region9
    $region8: #{tpu_custom_call.1} parent=1 // pred_region
      _
    $region9: #{tpu_custom_call.1} parent=1 // pred_fallthru
      _
    // Predicated region
    $region10: #{tpu_custom_call.1} parent=1 // pred_check
      _
    $region11: #{tpu_custom_call.1} parent=1 // pred_check_branch
      %23 = sbr.rel (0) target = $region13
    $region12: #{tpu_custom_call.1} parent=1 // pred_region
      %s25 = ssub.s32 16, 16
      %26 = vsyncadd [#allocation3], %s25
      %s28 = sshll.u32 [#allocation2], 4
      %s29 = int_to_ptr.vmem [resolvable:$true] %s28
      %31 = dma.hbm_to_vmem [thread:$0]  %s2, 16, %s29, [#allocation3]
    $region13: #{tpu_custom_call.1} parent=1 // pred_fallthru
      _
    // Predicated region
    $region14: #{tpu_custom_call.1} parent=1 // pred_check
      _
    $region15: #{tpu_custom_call.1} parent=1 // pred_check_branch
      %33 = sbr.rel (0) target = $region17
    $region16: #{tpu_custom_call.1} parent=1 // pred_region
      _
    $region17: #{tpu_custom_call.1} parent=1 // pred_fallthru
      _
    // Predicated region
    $region18: #{tpu_custom_call.1} parent=1 // pred_check
      _
    $region19: #{tpu_custom_call.1} parent=1 // pred_check_branch
      %35 = sbr.rel (0) target = $region21
    $region20: #{tpu_custom_call.1} parent=1 // pred_region
      _
    $region21: #{tpu_custom_call.1} parent=1 // pred_fallthru
      _
    // Predicated region
    $region22: #{tpu_custom_call.1} parent=1 // pred_check
      _
    $region23: #{tpu_custom_call.1} parent=1 // pred_check_branch
      %37 = sbr.rel (0) target = $region25
    $region24: #{tpu_custom_call.1} parent=1 // pred_region
      %s39 = ssub.s32 768, 768
      %40 = vsyncadd [#allocation5], %s39
      %s41 = sshll.u32 [#allocation4], 4
      %s42 = int_to_ptr.vmem [resolvable:$true] %s41
      %47 = dma.hbm_to_vmem [thread:$0]  %s5, 768, %s42, [#allocation5], 128, 128, 8
    $region25: #{tpu_custom_call.1} parent=1 // pred_fallthru
      _
    // Predicated region
    $region26: #{tpu_custom_call.1} parent=1 // pred_check
      _
    $region27: #{tpu_custom_call.1} parent=1 // pred_check_branch
      %49 = sbr.rel (0) target = $region29
    $region28: #{tpu_custom_call.1} parent=1 // pred_region
      _
    $region29: #{tpu_custom_call.1} parent=1 // pred_fallthru
      _
    // Predicated region
    $region30: #{tpu_custom_call.1} parent=1 // pred_check
      _
    $region31: #{tpu_custom_call.1} parent=1 // pred_check_branch
      %51 = sbr.rel (0) target = $region33
    $region32: #{tpu_custom_call.1} parent=1 // pred_region
      %s53 = ssub.s32 256, 256
      %54 = vsyncadd [#allocation5], %s53
      %s55 = sshll.u32 [#allocation6], 4
      %s56 = int_to_ptr.vmem [resolvable:$true] %s55
      %61 = dma.hbm_to_vmem [thread:$0]  %s7, 256, %s56, [#allocation5], 128, 128, 8
    $region33: #{tpu_custom_call.1} parent=1 // pred_fallthru
      _
    // Predicated region
    $region34: #{tpu_custom_call.1} parent=1 // pred_check
      _
    $region35: #{tpu_custom_call.1} parent=1 // pred_check_branch
      %63 = sbr.rel (0) target = $region37
    $region36: #{tpu_custom_call.1} parent=1 // pred_region
      _
    $region37: #{tpu_custom_call.1} parent=1 // pred_fallthru
      _
    // Predicated region
    $region38: #{tpu_custom_call.1} parent=1 // pred_check
      _
    $region39: #{tpu_custom_call.1} parent=1 // pred_check_branch
      %65 = sbr.rel (0) target = $region41
    $region40: #{tpu_custom_call.1} parent=1 // pred_region
      _
    $region41: #{tpu_custom_call.1} parent=1 // pred_fallthru
      _
    // Predicated region
    $region42: #{tpu_custom_call.1} parent=1 // pred_check
      _
    $region43: #{tpu_custom_call.1} parent=1 // pred_check_branch
      %67 = sbr.rel (0) target = $region45
    $region44: #{tpu_custom_call.1} parent=1 // pred_region
      _
    $region45: #{tpu_custom_call.1} parent=1 // pred_fallthru
      _
    // Predicated region
    $region46: #{tpu_custom_call.1} parent=1 // pred_check
      _
    $region47: #{tpu_custom_call.1} parent=1 // pred_check_branch
      %69 = sbr.rel (0) target = $region49
    $region48: #{tpu_custom_call.1} parent=1 // pred_region
      %70 = dma.done [#allocation3], 16
    $region49: #{tpu_custom_call.1} parent=1 // pred_fallthru
      _
    // Predicated region
    $region50: #{tpu_custom_call.1} parent=1 // pred_check
      _
    $region51: #{tpu_custom_call.1} parent=1 // pred_check_branch
      %72 = sbr.rel (0) target = $region53
    $region52: #{tpu_custom_call.1} parent=1 // pred_region
      %73 = dma.done [#allocation5], 768
    $region53: #{tpu_custom_call.1} parent=1 // pred_fallthru
      _
    // Predicated region
    $region54: #{tpu_custom_call.1} parent=1 // pred_check
      _
    $region55: #{tpu_custom_call.1} parent=1 // pred_check_branch
      %75 = sbr.rel (0) target = $region57
    $region56: #{tpu_custom_call.1} parent=1 // pred_region
      %76 = dma.done [#allocation5], 256
    $region57: #{tpu_custom_call.1} parent=1 // pred_fallthru
      _
    %v77 = vld [vmem:[%s0] sm:$0xff]
    %v78 = vld [vmem:[%s0 + $0x8] sm:$0xff]
    %v79 = vld [vmem:[%s0 + $0x10] sm:$0xff]
    %v80 = vld [vmem:[%s0 + $0x18] sm:$0xff]
    %v81 = vld [vmem:[%s1] sm:$0xff]
    %v82 = vld [vmem:[%s1 + $0x8] sm:$0xff]
    %v83 = vld [vmem:[%s1 + $0x10] sm:$0xff]
    %v84 = vld [vmem:[%s1 + $0x18] sm:$0xff]
    %v85 = vld [vmem:[%s1 + $0x20] sm:$0xff]
    %v86 = vld [vmem:[%s1 + $0x28] sm:$0xff]
    %v87 = vld [vmem:[#allocation2] sm:$0x1]
    %v89 = vlaneseq
    %v90 = vshrl.u32 %v89, 7
    %v91 = vsub.s32 0, %v90
    %v92 = vrot.slane %v87, %v91
    %vm94 = vcmask 392192
    %v96 = vsel %vm94, %v77, 0
    %v99 = vsel %vm94, %v78, 0
    %v102 = vsel %vm94, %v79, 0
    %v105 = vsel %vm94, %v80, 0
    %107 = vmatprep.subr.mxu0 0.0
    %108 = vmatpush1.msra.mxu0 0.0
    %109 = vmatprep.subr.mxu0 0.0
    %110 = vmatpush1.msra.mxu0 0.0
    %111 = vmatprep.subr.mxu0 0.0
    %112 = vmatpush1.msra.mxu0 0.0
    %113 = vmatprep.subr.mxu0 0.0
    %114 = vmatpush1.msra.mxu0 0.0
    %115 = vmatprep.subr.mxu0 0.0
    %116 = vmatpush1.msra.mxu0 0.0
    %117 = vmatprep.subr.mxu0 0.0
    %118 = vmatpush1.msra.mxu0 0.0
    %119 = vmatprep.subr.mxu0 0.0
    %120 = vmatpush1.msra.mxu0 0.0
    %121 = vmatprep.subr.mxu0 0.0
    %122 = vmatpush1.msra.mxu0 0.0
    %123 = vmatprep.subr.mxu0 0.0
    %124 = vmatpush1.msra.mxu0 0.0
    %125 = vmatprep.subr.mxu0 0.0
    %126 = vmatpush1.msra.mxu0 0.0
    %127 = vmatprep.subr.mxu0 0.0
    %128 = vmatpush1.msra.mxu0 %v86
    %129 = vmatprep.subr.mxu0 0.0
    %130 = vmatpush1.msra.mxu0 %v85
    %131 = vmatprep.subr.mxu0 0.0
    %132 = vmatpush1.msra.mxu0 %v84
    %133 = vmatprep.subr.mxu0 0.0
    %134 = vmatpush1.msra.mxu0 %v83
    %135 = vmatprep.subr.mxu0 0.0
    %136 = vmatpush1.msra.mxu0 %v82
    %137 = vmatprep.subr.mxu0 0.0
    %138 = vmatpush1.msra.mxu0 %v81
    %139 = vmatprep.subr.mxu0 0.0
    %140 = vmatpush2.msra.mxu0 0.0
    %141 = vmatprep.subr.mxu0 0.0
    %142 = vmatpush2.msra.mxu0 0.0
    %143 = vmatprep.subr.mxu0 0.0
    %144 = vmatpush2.msra.mxu0 0.0
    %145 = vmatprep.subr.mxu0 0.0
    %146 = vmatpush2.msra.mxu0 0.0
    %147 = vmatprep.subr.mxu0 0.0
    %148 = vmatpush2.msra.mxu0 0.0
    %149 = vmatprep.subr.mxu0 0.0
    %150 = vmatpush2.msra.mxu0 0.0
    %151 = vmatprep.subr.mxu0 0.0
    %152 = vmatpush2.msra.mxu0 0.0
    %153 = vmatprep.subr.mxu0 0.0
    %154 = vmatpush2.msra.mxu0 0.0
    %155 = vmatprep.subr.mxu0 0.0
    %156 = vmatpush2.msra.mxu0 0.0
    %157 = vmatprep.subr.mxu0 0.0
    %158 = vmatpush2.msra.mxu0 0.0
    %159 = vmatprep.subr.mxu0 0.0
    %160 = vmatpush2.msra.mxu0 0.0
    %161 = vmatprep.subr.mxu0 0.0
    %162 = vmatpush2.msra.mxu0 0.0
    %163 = vmatprep.subr.mxu0 0.0
    %164 = vmatpush2.msra.mxu0 0.0
    %165 = vmatprep.subr.mxu0 0.0
    %166 = vmatpush2.msra.mxu0 0.0
    %167 = vmatprep.subr.mxu0 0.0
    %168 = vmatpush2.msra.mxu0 0.0
    %169 = vmatprep.subr.mxu0 0.0
    %170 = vmatpush2.msra.mxu0 0.0
    %171 = vmatprep.mubr.f32.mxu0 0.0
    %172 = vmatmul.mubr.f32.gmra.mxu0 %v96
    %v173 = vpop.f32.mrf.mxu0
    %v174 = vadd.f32 %v92, %v173
    %v175 = vpop.f32.mrf.mxu0
    %176 = vmatprep.mubr.f32.mxu0 0.0
    %177 = vmatmul.mubr.f32.gmra.mxu0 %v99
    %v178 = vpop.f32.mrf.mxu0
    %v179 = vadd.f32 %v92, %v178
    %v180 = vpop.f32.mrf.mxu0
    %181 = vmatprep.mubr.f32.mxu0 0.0
    %182 = vmatmul.mubr.f32.gmra.mxu0 %v102
    %v183 = vpop.f32.mrf.mxu0
    %v184 = vadd.f32 %v92, %v183
    %v185 = vpop.f32.mrf.mxu0
    %186 = vmatprep.mubr.f32.mxu0 0.0
    %187 = vmatmul.mubr.f32.gmra.mxu0 %v105
    %v188 = vpop.f32.mrf.mxu0
    %v189 = vadd.f32 %v92, %v188
    %v190 = vpop.f32.mrf.mxu0
    %191 = vdwg.mxu0
    %v192 = vld [vmem:[%s3] sm:$0xff]
    %v193 = vld [vmem:[%s3 + $0x8] sm:$0xff]
    %v194 = vld [vmem:[%s3 + $0x10] sm:$0xff]
    %v195 = vld [vmem:[%s3 + $0x18] sm:$0xff]
    %v196 = vld [vmem:[%s3 + $0x20] sm:$0xff]
    %v197 = vld [vmem:[%s3 + $0x28] sm:$0xff]
    %v199 = vsel %vm94, %v174, 0
    %v202 = vsel %vm94, %v179, 0
    %v205 = vsel %vm94, %v184, 0
    %v208 = vsel %vm94, %v189, 0
    %210 = vmatprep.subr.mxu0 0.0
    %211 = vmatpush1.msra.mxu0 0.0
    %212 = vmatprep.subr.mxu0 0.0
    %213 = vmatpush1.msra.mxu0 0.0
    %214 = vmatprep.subr.mxu0 0.0
    %215 = vmatpush1.msra.mxu0 0.0
    %216 = vmatprep.subr.mxu0 0.0
    %217 = vmatpush1.msra.mxu0 0.0
    %218 = vmatprep.subr.mxu0 0.0
    %219 = vmatpush1.msra.mxu0 0.0
    %220 = vmatprep.subr.mxu0 0.0
    %221 = vmatpush1.msra.mxu0 0.0
    %222 = vmatprep.subr.mxu0 0.0
    %223 = vmatpush1.msra.mxu0 0.0
    %224 = vmatprep.subr.mxu0 0.0
    %225 = vmatpush1.msra.mxu0 0.0
    %226 = vmatprep.subr.mxu0 0.0
    %227 = vmatpush1.msra.mxu0 0.0
    %228 = vmatprep.subr.mxu0 0.0
    %229 = vmatpush1.msra.mxu0 0.0
    %230 = vmatprep.subr.mxu0 0.0
    %231 = vmatpush1.msra.mxu0 %v197
    %232 = vmatprep.subr.mxu0 0.0
    %233 = vmatpush1.msra.mxu0 %v196
    %234 = vmatprep.subr.mxu0 0.0
    %235 = vmatpush1.msra.mxu0 %v195
    %236 = vmatprep.subr.mxu0 0.0
    %237 = vmatpush1.msra.mxu0 %v194
    %238 = vmatprep.subr.mxu0 0.0
    %239 = vmatpush1.msra.mxu0 %v193
    %240 = vmatprep.subr.mxu0 0.0
    %241 = vmatpush1.msra.mxu0 %v192
    %242 = vmatprep.subr.mxu0 0.0
    %243 = vmatpush2.msra.mxu0 0.0
    %244 = vmatprep.subr.mxu0 0.0
    %245 = vmatpush2.msra.mxu0 0.0
    %246 = vmatprep.subr.mxu0 0.0
    %247 = vmatpush2.msra.mxu0 0.0
    %248 = vmatprep.subr.mxu0 0.0
    %249 = vmatpush2.msra.mxu0 0.0
    %250 = vmatprep.subr.mxu0 0.0
    %251 = vmatpush2.msra.mxu0 0.0
    %252 = vmatprep.subr.mxu0 0.0
    %253 = vmatpush2.msra.mxu0 0.0
    %254 = vmatprep.subr.mxu0 0.0
    %255 = vmatpush2.msra.mxu0 0.0
    %256 = vmatprep.subr.mxu0 0.0
    %257 = vmatpush2.msra.mxu0 0.0
    %258 = vmatprep.subr.mxu0 0.0
    %259 = vmatpush2.msra.mxu0 0.0
    %260 = vmatprep.subr.mxu0 0.0
    %261 = vmatpush2.msra.mxu0 0.0
    %262 = vmatprep.subr.mxu0 0.0
    %263 = vmatpush2.msra.mxu0 0.0
    %264 = vmatprep.subr.mxu0 0.0
    %265 = vmatpush2.msra.mxu0 0.0
    %266 = vmatprep.subr.mxu0 0.0
    %267 = vmatpush2.msra.mxu0 0.0
    %268 = vmatprep.subr.mxu0 0.0
    %269 = vmatpush2.msra.mxu0 0.0
    %270 = vmatprep.subr.mxu0 0.0
    %271 = vmatpush2.msra.mxu0 0.0
    %272 = vmatprep.subr.mxu0 0.0
    %273 = vmatpush2.msra.mxu0 0.0
    %274 = vmatprep.mubr.f32.mxu0 0.0
    %275 = vmatmul.mubr.f32.gmra.mxu0 %v199
    %v276 = vpop.f32.mrf.mxu0
    %v277 = vadd.f32 0.0, %v276
    %v278 = vpop.f32.mrf.mxu0
    %279 = vmatprep.mubr.f32.mxu0 0.0
    %280 = vmatmul.mubr.f32.gmra.mxu0 %v202
    %v281 = vpop.f32.mrf.mxu0
    %v282 = vadd.f32 0.0, %v281
    %v283 = vpop.f32.mrf.mxu0
    %284 = vmatprep.mubr.f32.mxu0 0.0
    %285 = vmatmul.mubr.f32.gmra.mxu0 %v205
    %v286 = vpop.f32.mrf.mxu0
    %v287 = vadd.f32 0.0, %v286
    %v288 = vpop.f32.mrf.mxu0
    %289 = vmatprep.mubr.f32.mxu0 0.0
    %290 = vmatmul.mubr.f32.gmra.mxu0 %v208
    %v291 = vpop.f32.mrf.mxu0
    %v292 = vadd.f32 0.0, %v291
    %v293 = vpop.f32.mrf.mxu0
    %294 = vdwg.mxu0
    %v295 = vld [vmem:[%s4] sm:$0xff]
    %v296 = vld [vmem:[%s4 + $0x8] sm:$0xff]
    %v297 = vld [vmem:[%s4 + $0x10] sm:$0xff]
    %v298 = vld [vmem:[%s4 + $0x18] sm:$0xff]
    %v299 = vld [vmem:[%s4 + $0x20] sm:$0xff]
    %v300 = vld [vmem:[%s4 + $0x28] sm:$0xff]
    %301 = vmatprep.subr.mxu0 0.0
    %302 = vmatpush1.msra.mxu0 0.0
    %303 = vmatprep.subr.mxu0 0.0
    %304 = vmatpush1.msra.mxu0 0.0
    %305 = vmatprep.subr.mxu0 0.0
    %306 = vmatpush1.msra.mxu0 0.0
    %307 = vmatprep.subr.mxu0 0.0
    %308 = vmatpush1.msra.mxu0 0.0
    %309 = vmatprep.subr.mxu0 0.0
    %310 = vmatpush1.msra.mxu0 0.0
    %311 = vmatprep.subr.mxu0 0.0
    %312 = vmatpush1.msra.mxu0 0.0
    %313 = vmatprep.subr.mxu0 0.0
    %314 = vmatpush1.msra.mxu0 0.0
    %315 = vmatprep.subr.mxu0 0.0
    %316 = vmatpush1.msra.mxu0 0.0
    %317 = vmatprep.subr.mxu0 0.0
    %318 = vmatpush1.msra.mxu0 0.0
    %319 = vmatprep.subr.mxu0 0.0
    %320 = vmatpush1.msra.mxu0 0.0
    %321 = vmatprep.subr.mxu0 0.0
    %322 = vmatpush1.msra.mxu0 %v300
    %323 = vmatprep.subr.mxu0 0.0
    %324 = vmatpush1.msra.mxu0 %v299
    %325 = vmatprep.subr.mxu0 0.0
    %326 = vmatpush1.msra.mxu0 %v298
    %327 = vmatprep.subr.mxu0 0.0
    %328 = vmatpush1.msra.mxu0 %v297
    %329 = vmatprep.subr.mxu0 0.0
    %330 = vmatpush1.msra.mxu0 %v296
    %331 = vmatprep.subr.mxu0 0.0
    %332 = vmatpush1.msra.mxu0 %v295
    %333 = vmatprep.subr.mxu0 0.0
    %334 = vmatpush2.msra.mxu0 0.0
    %335 = vmatprep.subr.mxu0 0.0
    %336 = vmatpush2.msra.mxu0 0.0
    %337 = vmatprep.subr.mxu0 0.0
    %338 = vmatpush2.msra.mxu0 0.0
    %339 = vmatprep.subr.mxu0 0.0
    %340 = vmatpush2.msra.mxu0 0.0
    %341 = vmatprep.subr.mxu0 0.0
    %342 = vmatpush2.msra.mxu0 0.0
    %343 = vmatprep.subr.mxu0 0.0
    %344 = vmatpush2.msra.mxu0 0.0
    %345 = vmatprep.subr.mxu0 0.0
    %346 = vmatpush2.msra.mxu0 0.0
    %347 = vmatprep.subr.mxu0 0.0
    %348 = vmatpush2.msra.mxu0 0.0
    %349 = vmatprep.subr.mxu0 0.0
    %350 = vmatpush2.msra.mxu0 0.0
    %351 = vmatprep.subr.mxu0 0.0
    %352 = vmatpush2.msra.mxu0 0.0
    %353 = vmatprep.subr.mxu0 0.0
    %354 = vmatpush2.msra.mxu0 0.0
    %355 = vmatprep.subr.mxu0 0.0
    %356 = vmatpush2.msra.mxu0 0.0
    %357 = vmatprep.subr.mxu0 0.0
    %358 = vmatpush2.msra.mxu0 0.0
    %359 = vmatprep.subr.mxu0 0.0
    %360 = vmatpush2.msra.mxu0 0.0
    %361 = vmatprep.subr.mxu0 0.0
    %362 = vmatpush2.msra.mxu0 0.0
    %363 = vmatprep.subr.mxu0 0.0
    %364 = vmatpush2.msra.mxu0 0.0
    %365 = vmatprep.mubr.f32.mxu0 0.0
    %366 = vmatmul.mubr.f32.gmra.mxu0 %v199
    %v367 = vpop.f32.mrf.mxu0
    %v368 = vadd.f32 0.0, %v367
    %v369 = vpop.f32.mrf.mxu0
    %370 = vmatprep.mubr.f32.mxu0 0.0
    %371 = vmatmul.mubr.f32.gmra.mxu0 %v202
    %v372 = vpop.f32.mrf.mxu0
    %v373 = vadd.f32 0.0, %v372
    %v374 = vpop.f32.mrf.mxu0
    %375 = vmatprep.mubr.f32.mxu0 0.0
    %376 = vmatmul.mubr.f32.gmra.mxu0 %v205
    %v377 = vpop.f32.mrf.mxu0
    %v378 = vadd.f32 0.0, %v377
    %v379 = vpop.f32.mrf.mxu0
    %380 = vmatprep.mubr.f32.mxu0 0.0
    %381 = vmatmul.mubr.f32.gmra.mxu0 %v208
    %v382 = vpop.f32.mrf.mxu0
    %v383 = vadd.f32 0.0, %v382
    %v384 = vpop.f32.mrf.mxu0
    %385 = vdwg.mxu0
    %v386 = vmul.f32 %v277, %v368
    %v387 = vmul.f32 %v282, %v373
    %v388 = vmul.f32 %v287, %v378
    %v389 = vmul.f32 %v292, %v383
    %v390 = vld [vmem:[%s6] sm:$0xff]
    %v391 = vld [vmem:[%s6 + $0x8] sm:$0xff]
    %v392 = vld [vmem:[%s6 + $0x10] sm:$0xff]
    %v393 = vld [vmem:[%s6 + $0x18] sm:$0xff]
    %v394 = vld [vmem:[%s6 + $0x20] sm:$0xff]
    %v395 = vld [vmem:[%s6 + $0x28] sm:$0xff]
    %v396 = vld [vmem:[%s6 + $0x30] sm:$0xff]
    %v397 = vld [vmem:[%s6 + $0x38] sm:$0xff]
    %vm398 = vcmask 523264
    %v400 = vsel %vm398, %v386, 0
    %v403 = vsel %vm398, %v387, 0
    %v406 = vsel %vm398, %v388, 0
    %v409 = vsel %vm398, %v389, 0
    %411 = vmatprep.subr.mxu0 0.0
    %412 = vmatpush1.msra.mxu0 0.0
    %413 = vmatprep.subr.mxu0 0.0
    %414 = vmatpush1.msra.mxu0 0.0
    %415 = vmatprep.subr.mxu0 0.0
    %416 = vmatpush1.msra.mxu0 0.0
    %417 = vmatprep.subr.mxu0 0.0
    %418 = vmatpush1.msra.mxu0 0.0
    %419 = vmatprep.subr.mxu0 0.0
    %420 = vmatpush1.msra.mxu0 0.0
    %421 = vmatprep.subr.mxu0 0.0
    %422 = vmatpush1.msra.mxu0 0.0
    %423 = vmatprep.subr.mxu0 0.0
    %424 = vmatpush1.msra.mxu0 0.0
    %425 = vmatprep.subr.mxu0 0.0
    %426 = vmatpush1.msra.mxu0 0.0
    %427 = vmatprep.subr.mxu0 0.0
    %428 = vmatpush1.msra.mxu0 %v397
    %429 = vmatprep.subr.mxu0 0.0
    %430 = vmatpush1.msra.mxu0 %v396
    %431 = vmatprep.subr.mxu0 0.0
    %432 = vmatpush1.msra.mxu0 %v395
    %433 = vmatprep.subr.mxu0 0.0
    %434 = vmatpush1.msra.mxu0 %v394
    %435 = vmatprep.subr.mxu0 0.0
    %436 = vmatpush1.msra.mxu0 %v393
    %437 = vmatprep.subr.mxu0 0.0
    %438 = vmatpush1.msra.mxu0 %v392
    %439 = vmatprep.subr.mxu0 0.0
    %440 = vmatpush1.msra.mxu0 %v391
    %441 = vmatprep.subr.mxu0 0.0
    %442 = vmatpush1.msra.mxu0 %v390
    %443 = vmatprep.subr.mxu0 0.0
    %444 = vmatpush2.msra.mxu0 0.0
    %445 = vmatprep.subr.mxu0 0.0
    %446 = vmatpush2.msra.mxu0 0.0
    %447 = vmatprep.subr.mxu0 0.0
    %448 = vmatpush2.msra.mxu0 0.0
    %449 = vmatprep.subr.mxu0 0.0
    %450 = vmatpush2.msra.mxu0 0.0
    %451 = vmatprep.subr.mxu0 0.0
    %452 = vmatpush2.msra.mxu0 0.0
    %453 = vmatprep.subr.mxu0 0.0
    %454 = vmatpush2.msra.mxu0 0.0
    %455 = vmatprep.subr.mxu0 0.0
    %456 = vmatpush2.msra.mxu0 0.0
    %457 = vmatprep.subr.mxu0 0.0
    %458 = vmatpush2.msra.mxu0 0.0
    %459 = vmatprep.subr.mxu0 0.0
    %460 = vmatpush2.msra.mxu0 0.0
    %461 = vmatprep.subr.mxu0 0.0
    %462 = vmatpush2.msra.mxu0 0.0
    %463 = vmatprep.subr.mxu0 0.0
    %464 = vmatpush2.msra.mxu0 0.0
    %465 = vmatprep.subr.mxu0 0.0
    %466 = vmatpush2.msra.mxu0 0.0
    %467 = vmatprep.subr.mxu0 0.0
    %468 = vmatpush2.msra.mxu0 0.0
    %469 = vmatprep.subr.mxu0 0.0
    %470 = vmatpush2.msra.mxu0 0.0
    %471 = vmatprep.subr.mxu0 0.0
    %472 = vmatpush2.msra.mxu0 0.0
    %473 = vmatprep.subr.mxu0 0.0
    %474 = vmatpush2.msra.mxu0 0.0
    %475 = vmatprep.mubr.f32.mxu0 0.0
    %476 = vmatmul.mubr.f32.gmra.mxu0 %v400
    %v477 = vpop.f32.mrf.mxu0
    %v478 = vadd.f32 0.0, %v477
    %v479 = vpop.f32.mrf.mxu0
    %480 = vmatprep.mubr.f32.mxu0 0.0
    %481 = vmatmul.mubr.f32.gmra.mxu0 %v403
    %v482 = vpop.f32.mrf.mxu0
    %v483 = vadd.f32 0.0, %v482
    %v484 = vpop.f32.mrf.mxu0
    %485 = vmatprep.mubr.f32.mxu0 0.0
    %486 = vmatmul.mubr.f32.gmra.mxu0 %v406
    %v487 = vpop.f32.mrf.mxu0
    %v488 = vadd.f32 0.0, %v487
    %v489 = vpop.f32.mrf.mxu0
    %490 = vmatprep.mubr.f32.mxu0 0.0
    %491 = vmatmul.mubr.f32.gmra.mxu0 %v409
    %v492 = vpop.f32.mrf.mxu0
    %v493 = vadd.f32 0.0, %v492
    %v494 = vpop.f32.mrf.mxu0
    %495 = vdwg.mxu0
    %v496 = vmul.f32 %v478, 0.5
    %v497 = vmul.f32 %v483, 0.5
    %v498 = vmul.f32 %v488, 0.5
    %v499 = vmul.f32 %v493, 0.5
    %v500 = vmax.f32 %v496, %v498
    %v501 = vmax.f32 %v497, %v499
    %v502 = vsub.f32 %v496, %v500
    %v503 = vsub.f32 %v497, %v501
    %v504 = vmul.f32 %v502, 1.442695
    %v505 = vpow.pop %v504
    %v506 = vmul.f32 %v503, 1.442695
    %v507 = vpow.pop %v506
    %v508 = vsub.f32 %v498, %v500
    %v509 = vsub.f32 %v499, %v501
    %v510 = vmul.f32 %v508, 1.442695
    %v511 = vpow.pop %v510
    %v512 = vmul.f32 %v509, 1.442695
    %v513 = vpow.pop %v512
    %v514 = vadd.f32 %v505, %v511
    %v515 = vadd.f32 %v507, %v513
    %v516 = vrcp.pop %v514
    %v517 = vrcp.pop %v515
    %v518 = vmul.f32 %v505, %v516
    %v519 = vmul.f32 %v507, %v517
    %v520 = vmul.f32 %v511, %v516
    %v521 = vmul.f32 %v513, %v517
    %v522 = vld [vmem:[#allocation6] sm:$0xff]
    %v523 = vld [vmem:[#allocation6 + $0x8] sm:$0xff]
    %vm524 = vcmask 130048
    %v526 = vsel %vm524, %v518, 0
    %v529 = vsel %vm524, %v519, 0
    %v532 = vsel %vm524, %v520, 0
    %v535 = vsel %vm524, %v521, 0
    %537 = vmatprep.subr.mxu0 0.0
    %538 = vmatpush1.msra.mxu0 0.0
    %539 = vmatprep.subr.mxu0 0.0
    %540 = vmatpush1.msra.mxu0 0.0
    %541 = vmatprep.subr.mxu0 0.0
    %542 = vmatpush1.msra.mxu0 0.0
    %543 = vmatprep.subr.mxu0 0.0
    %544 = vmatpush1.msra.mxu0 0.0
    %545 = vmatprep.subr.mxu0 0.0
    %546 = vmatpush1.msra.mxu0 0.0
    %547 = vmatprep.subr.mxu0 0.0
    %548 = vmatpush1.msra.mxu0 0.0
    %549 = vmatprep.subr.mxu0 0.0
    %550 = vmatpush1.msra.mxu0 0.0
    %551 = vmatprep.subr.mxu0 0.0
    %552 = vmatpush1.msra.mxu0 0.0
    %553 = vmatprep.subr.mxu0 0.0
    %554 = vmatpush1.msra.mxu0 0.0
    %555 = vmatprep.subr.mxu0 0.0
    %556 = vmatpush1.msra.mxu0 0.0
    %557 = vmatprep.subr.mxu0 0.0
    %558 = vmatpush1.msra.mxu0 0.0
    %559 = vmatprep.subr.mxu0 0.0
    %560 = vmatpush1.msra.mxu0 0.0
    %561 = vmatprep.subr.mxu0 0.0
    %562 = vmatpush1.msra.mxu0 0.0
    %563 = vmatprep.subr.mxu0 0.0
    %564 = vmatpush1.msra.mxu0 0.0
    %565 = vmatprep.subr.mxu0 0.0
    %566 = vmatpush1.msra.mxu0 %v523
    %567 = vmatprep.subr.mxu0 0.0
    %568 = vmatpush1.msra.mxu0 %v522
    %569 = vmatprep.subr.mxu0 0.0
    %570 = vmatpush2.msra.mxu0 0.0
    %571 = vmatprep.subr.mxu0 0.0
    %572 = vmatpush2.msra.mxu0 0.0
    %573 = vmatprep.subr.mxu0 0.0
    %574 = vmatpush2.msra.mxu0 0.0
    %575 = vmatprep.subr.mxu0 0.0
    %576 = vmatpush2.msra.mxu0 0.0
    %577 = vmatprep.subr.mxu0 0.0
    %578 = vmatpush2.msra.mxu0 0.0
    %579 = vmatprep.subr.mxu0 0.0
    %580 = vmatpush2.msra.mxu0 0.0
    %581 = vmatprep.subr.mxu0 0.0
    %582 = vmatpush2.msra.mxu0 0.0
    %583 = vmatprep.subr.mxu0 0.0
    %584 = vmatpush2.msra.mxu0 0.0
    %585 = vmatprep.subr.mxu0 0.0
    %586 = vmatpush2.msra.mxu0 0.0
    %587 = vmatprep.subr.mxu0 0.0
    %588 = vmatpush2.msra.mxu0 0.0
    %589 = vmatprep.subr.mxu0 0.0
    %590 = vmatpush2.msra.mxu0 0.0
    %591 = vmatprep.subr.mxu0 0.0
    %592 = vmatpush2.msra.mxu0 0.0
    %593 = vmatprep.subr.mxu0 0.0
    %594 = vmatpush2.msra.mxu0 0.0
    %595 = vmatprep.subr.mxu0 0.0
    %596 = vmatpush2.msra.mxu0 0.0
    %597 = vmatprep.subr.mxu0 0.0
    %598 = vmatpush2.msra.mxu0 0.0
    %599 = vmatprep.subr.mxu0 0.0
    %600 = vmatpush2.msra.mxu0 0.0
    %601 = vmatprep.mubr.f32.mxu0 0.0
    %602 = vmatmul.mubr.f32.gmra.mxu0 %v526
    %v603 = vpop.f32.mrf.mxu0
    %v604 = vadd.f32 0.0, %v603
    %v605 = vpop.f32.mrf.mxu0
    %606 = vmatprep.mubr.f32.mxu0 0.0
    %607 = vmatmul.mubr.f32.gmra.mxu0 %v529
    %v608 = vpop.f32.mrf.mxu0
    %v609 = vadd.f32 0.0, %v608
    %v610 = vpop.f32.mrf.mxu0
    %611 = vmatprep.mubr.f32.mxu0 0.0
    %612 = vmatmul.mubr.f32.gmra.mxu0 %v532
    %v613 = vpop.f32.mrf.mxu0
    %v614 = vadd.f32 0.0, %v613
    %v615 = vpop.f32.mrf.mxu0
    %616 = vmatprep.mubr.f32.mxu0 0.0
    %617 = vmatmul.mubr.f32.gmra.mxu0 %v535
    %v618 = vpop.f32.mrf.mxu0
    %v619 = vadd.f32 0.0, %v618
    %v620 = vpop.f32.mrf.mxu0
    %621 = vdwg.mxu0
    %v622 = vld [vmem:[#allocation4] sm:$0xff]
    %v623 = vld [vmem:[#allocation4 + $0x8] sm:$0xff]
    %v624 = vld [vmem:[#allocation4 + $0x10] sm:$0xff]
    %v625 = vld [vmem:[#allocation4 + $0x18] sm:$0xff]
    %v626 = vld [vmem:[#allocation4 + $0x20] sm:$0xff]
    %v627 = vld [vmem:[#allocation4 + $0x28] sm:$0xff]
    %628 = vmatprep.subr.mxu0 0.0
    %629 = vmatpush1.msra.mxu0 0.0
    %630 = vmatprep.subr.mxu0 0.0
    %631 = vmatpush1.msra.mxu0 0.0
    %632 = vmatprep.subr.mxu0 0.0
    %633 = vmatpush1.msra.mxu0 0.0
    %634 = vmatprep.subr.mxu0 0.0
    %635 = vmatpush1.msra.mxu0 0.0
    %636 = vmatprep.subr.mxu0 0.0
    %637 = vmatpush1.msra.mxu0 0.0
    %638 = vmatprep.subr.mxu0 0.0
    %639 = vmatpush1.msra.mxu0 0.0
    %640 = vmatprep.subr.mxu0 0.0
    %641 = vmatpush1.msra.mxu0 0.0
    %642 = vmatprep.subr.mxu0 0.0
    %643 = vmatpush1.msra.mxu0 0.0
    %644 = vmatprep.subr.mxu0 0.0
    %645 = vmatpush1.msra.mxu0 0.0
    %646 = vmatprep.subr.mxu0 0.0
    %647 = vmatpush1.msra.mxu0 0.0
    %648 = vmatprep.subr.mxu0 0.0
    %649 = vmatpush1.msra.mxu0 %v627
    %650 = vmatprep.subr.mxu0 0.0
    %651 = vmatpush1.msra.mxu0 %v626
    %652 = vmatprep.subr.mxu0 0.0
    %653 = vmatpush1.msra.mxu0 %v625
    %654 = vmatprep.subr.mxu0 0.0
    %655 = vmatpush1.msra.mxu0 %v624
    %656 = vmatprep.subr.mxu0 0.0
    %657 = vmatpush1.msra.mxu0 %v623
    %658 = vmatprep.subr.mxu0 0.0
    %659 = vmatpush1.msra.mxu0 %v622
    %660 = vmatprep.subr.mxu0 0.0
    %661 = vmatpush2.msra.mxu0 0.0
    %662 = vmatprep.subr.mxu0 0.0
    %663 = vmatpush2.msra.mxu0 0.0
    %664 = vmatprep.subr.mxu0 0.0
    %665 = vmatpush2.msra.mxu0 0.0
    %666 = vmatprep.subr.mxu0 0.0
    %667 = vmatpush2.msra.mxu0 0.0
    %668 = vmatprep.subr.mxu0 0.0
    %669 = vmatpush2.msra.mxu0 0.0
    %670 = vmatprep.subr.mxu0 0.0
    %671 = vmatpush2.msra.mxu0 0.0
    %672 = vmatprep.subr.mxu0 0.0
    %673 = vmatpush2.msra.mxu0 0.0
    %674 = vmatprep.subr.mxu0 0.0
    %675 = vmatpush2.msra.mxu0 0.0
    %676 = vmatprep.subr.mxu0 0.0
    %677 = vmatpush2.msra.mxu0 0.0
    %678 = vmatprep.subr.mxu0 0.0
    %679 = vmatpush2.msra.mxu0 0.0
    %680 = vmatprep.subr.mxu0 0.0
    %681 = vmatpush2.msra.mxu0 0.0
    %682 = vmatprep.subr.mxu0 0.0
    %683 = vmatpush2.msra.mxu0 0.0
    %684 = vmatprep.subr.mxu0 0.0
    %685 = vmatpush2.msra.mxu0 0.0
    %686 = vmatprep.subr.mxu0 0.0
    %687 = vmatpush2.msra.mxu0 0.0
    %688 = vmatprep.subr.mxu0 0.0
    %689 = vmatpush2.msra.mxu0 0.0
    %690 = vmatprep.subr.mxu0 0.0
    %691 = vmatpush2.msra.mxu0 0.0
    %692 = vmatprep.mubr.f32.mxu0 0.0
    %693 = vmatmul.mubr.f32.gmra.mxu0 %v199
    %v694 = vpop.f32.mrf.mxu0
    %v695 = vadd.f32 0.0, %v694
    %v696 = vpop.f32.mrf.mxu0
    %697 = vmatprep.mubr.f32.mxu0 0.0
    %698 = vmatmul.mubr.f32.gmra.mxu0 %v202
    %v699 = vpop.f32.mrf.mxu0
    %v700 = vadd.f32 0.0, %v699
    %v701 = vpop.f32.mrf.mxu0
    %702 = vmatprep.mubr.f32.mxu0 0.0
    %703 = vmatmul.mubr.f32.gmra.mxu0 %v205
    %v704 = vpop.f32.mrf.mxu0
    %v705 = vadd.f32 0.0, %v704
    %v706 = vpop.f32.mrf.mxu0
    %707 = vmatprep.mubr.f32.mxu0 0.0
    %708 = vmatmul.mubr.f32.gmra.mxu0 %v208
    %v709 = vpop.f32.mrf.mxu0
    %v710 = vadd.f32 0.0, %v709
    %v711 = vpop.f32.mrf.mxu0
    %712 = vdwg.mxu0
    %v713 = vmul.f32 %v604, %v695
    %v714 = vmul.f32 %v609, %v700
    %v715 = vmul.f32 %v614, %v705
    %v716 = vmul.f32 %v619, %v710
    %v717 = vld [vmem:[%s8] sm:$0xff]
    %v718 = vld [vmem:[%s8 + $0x8] sm:$0xff]
    %v719 = vld [vmem:[%s8 + $0x10] sm:$0xff]
    %v720 = vld [vmem:[%s8 + $0x18] sm:$0xff]
    %v721 = vld [vmem:[%s8 + $0x20] sm:$0xff]
    %v722 = vld [vmem:[%s8 + $0x28] sm:$0xff]
    %v723 = vld [vmem:[%s8 + $0x30] sm:$0xff]
    %v724 = vld [vmem:[%s8 + $0x38] sm:$0xff]
    %v726 = vsel %vm398, %v713, 0
    %v729 = vsel %vm398, %v714, 0
    %v732 = vsel %vm398, %v715, 0
    %v735 = vsel %vm398, %v716, 0
    %737 = vmatprep.subr.mxu0 0.0
    %738 = vmatpush1.msra.mxu0 0.0
    %739 = vmatprep.subr.mxu0 0.0
    %740 = vmatpush1.msra.mxu0 0.0
    %741 = vmatprep.subr.mxu0 0.0
    %742 = vmatpush1.msra.mxu0 0.0
    %743 = vmatprep.subr.mxu0 0.0
    %744 = vmatpush1.msra.mxu0 0.0
    %745 = vmatprep.subr.mxu0 0.0
    %746 = vmatpush1.msra.mxu0 0.0
    %747 = vmatprep.subr.mxu0 0.0
    %748 = vmatpush1.msra.mxu0 0.0
    %749 = vmatprep.subr.mxu0 0.0
    %750 = vmatpush1.msra.mxu0 0.0
    %751 = vmatprep.subr.mxu0 0.0
    %752 = vmatpush1.msra.mxu0 0.0
    %753 = vmatprep.subr.mxu0 0.0
    %754 = vmatpush1.msra.mxu0 %v724
    %755 = vmatprep.subr.mxu0 0.0
    %756 = vmatpush1.msra.mxu0 %v723
    %757 = vmatprep.subr.mxu0 0.0
    %758 = vmatpush1.msra.mxu0 %v722
    %759 = vmatprep.subr.mxu0 0.0
    %760 = vmatpush1.msra.mxu0 %v721
    %761 = vmatprep.subr.mxu0 0.0
    %762 = vmatpush1.msra.mxu0 %v720
    %763 = vmatprep.subr.mxu0 0.0
    %764 = vmatpush1.msra.mxu0 %v719
    %765 = vmatprep.subr.mxu0 0.0
    %766 = vmatpush1.msra.mxu0 %v718
    %767 = vmatprep.subr.mxu0 0.0
    %768 = vmatpush1.msra.mxu0 %v717
    %769 = vmatprep.subr.mxu0 0.0
    %770 = vmatpush2.msra.mxu0 0.0
    %771 = vmatprep.subr.mxu0 0.0
    %772 = vmatpush2.msra.mxu0 0.0
    %773 = vmatprep.subr.mxu0 0.0
    %774 = vmatpush2.msra.mxu0 0.0
    %775 = vmatprep.subr.mxu0 0.0
    %776 = vmatpush2.msra.mxu0 0.0
    %777 = vmatprep.subr.mxu0 0.0
    %778 = vmatpush2.msra.mxu0 0.0
    %779 = vmatprep.subr.mxu0 0.0
    %780 = vmatpush2.msra.mxu0 0.0
    %781 = vmatprep.subr.mxu0 0.0
    %782 = vmatpush2.msra.mxu0 0.0
    %783 = vmatprep.subr.mxu0 0.0
    %784 = vmatpush2.msra.mxu0 0.0
    %785 = vmatprep.subr.mxu0 0.0
    %786 = vmatpush2.msra.mxu0 0.0
    %787 = vmatprep.subr.mxu0 0.0
    %788 = vmatpush2.msra.mxu0 0.0
    %789 = vmatprep.subr.mxu0 0.0
    %790 = vmatpush2.msra.mxu0 0.0
    %791 = vmatprep.subr.mxu0 0.0
    %792 = vmatpush2.msra.mxu0 0.0
    %793 = vmatprep.subr.mxu0 0.0
    %794 = vmatpush2.msra.mxu0 0.0
    %795 = vmatprep.subr.mxu0 0.0
    %796 = vmatpush2.msra.mxu0 0.0
    %797 = vmatprep.subr.mxu0 0.0
    %798 = vmatpush2.msra.mxu0 0.0
    %799 = vmatprep.subr.mxu0 0.0
    %800 = vmatpush2.msra.mxu0 0.0
    %801 = vmatprep.mubr.f32.mxu0 0.0
    %802 = vmatmul.mubr.f32.gmra.mxu0 %v726
    %v803 = vpop.f32.mrf.mxu0
    %v804 = vadd.f32 0.0, %v803
    %v805 = vpop.f32.mrf.mxu0
    %806 = vmatprep.mubr.f32.mxu0 0.0
    %807 = vmatmul.mubr.f32.gmra.mxu0 %v729
    %v808 = vpop.f32.mrf.mxu0
    %v809 = vadd.f32 0.0, %v808
    %v810 = vpop.f32.mrf.mxu0
    %811 = vmatprep.mubr.f32.mxu0 0.0
    %812 = vmatmul.mubr.f32.gmra.mxu0 %v732
    %v813 = vpop.f32.mrf.mxu0
    %v814 = vadd.f32 0.0, %v813
    %v815 = vpop.f32.mrf.mxu0
    %816 = vmatprep.mubr.f32.mxu0 0.0
    %817 = vmatmul.mubr.f32.gmra.mxu0 %v735
    %v818 = vpop.f32.mrf.mxu0
    %v819 = vadd.f32 0.0, %v818
    %v820 = vpop.f32.mrf.mxu0
    %821 = vdwg.mxu0
    %v822 = vld [vmem:[%s9] sm:$0xff]
    %v823 = vld [vmem:[%s9 + $0x8] sm:$0xff]
    %v824 = vld [vmem:[%s10] sm:$0x1]
    %v826 = vlaneseq
    %v827 = vshrl.u32 %v826, 7
    %v828 = vsub.s32 0, %v827
    %v829 = vrot.slane %v824, %v828
    %v832 = vsel %vm524, %v804, 0
    %v835 = vsel %vm524, %v809, 0
    %v838 = vsel %vm524, %v814, 0
    %v841 = vsel %vm524, %v819, 0
    %843 = vmatprep.subr.mxu0 0.0
    %844 = vmatpush1.msra.mxu0 0.0
    %845 = vmatprep.subr.mxu0 0.0
    %846 = vmatpush1.msra.mxu0 0.0
    %847 = vmatprep.subr.mxu0 0.0
    %848 = vmatpush1.msra.mxu0 0.0
    %849 = vmatprep.subr.mxu0 0.0
    %850 = vmatpush1.msra.mxu0 0.0
    %851 = vmatprep.subr.mxu0 0.0
    %852 = vmatpush1.msra.mxu0 0.0
    %853 = vmatprep.subr.mxu0 0.0
    %854 = vmatpush1.msra.mxu0 0.0
    %855 = vmatprep.subr.mxu0 0.0
    %856 = vmatpush1.msra.mxu0 0.0
    %857 = vmatprep.subr.mxu0 0.0
    %858 = vmatpush1.msra.mxu0 0.0
    %859 = vmatprep.subr.mxu0 0.0
    %860 = vmatpush1.msra.mxu0 0.0
    %861 = vmatprep.subr.mxu0 0.0
    %862 = vmatpush1.msra.mxu0 0.0
    %863 = vmatprep.subr.mxu0 0.0
    %864 = vmatpush1.msra.mxu0 0.0
    %865 = vmatprep.subr.mxu0 0.0
    %866 = vmatpush1.msra.mxu0 0.0
    %867 = vmatprep.subr.mxu0 0.0
    %868 = vmatpush1.msra.mxu0 0.0
    %869 = vmatprep.subr.mxu0 0.0
    %870 = vmatpush1.msra.mxu0 0.0
    %871 = vmatprep.subr.mxu0 0.0
    %872 = vmatpush1.msra.mxu0 %v823
    %873 = vmatprep.subr.mxu0 0.0
    %874 = vmatpush1.msra.mxu0 %v822
    %875 = vmatprep.subr.mxu0 0.0
    %876 = vmatpush2.msra.mxu0 0.0
    %877 = vmatprep.subr.mxu0 0.0
    %878 = vmatpush2.msra.mxu0 0.0
    %879 = vmatprep.subr.mxu0 0.0
    %880 = vmatpush2.msra.mxu0 0.0
    %881 = vmatprep.subr.mxu0 0.0
    %882 = vmatpush2.msra.mxu0 0.0
    %883 = vmatprep.subr.mxu0 0.0
    %884 = vmatpush2.msra.mxu0 0.0
    %885 = vmatprep.subr.mxu0 0.0
    %886 = vmatpush2.msra.mxu0 0.0
    %887 = vmatprep.subr.mxu0 0.0
    %888 = vmatpush2.msra.mxu0 0.0
    %889 = vmatprep.subr.mxu0 0.0
    %890 = vmatpush2.msra.mxu0 0.0
    %891 = vmatprep.subr.mxu0 0.0
    %892 = vmatpush2.msra.mxu0 0.0
    %893 = vmatprep.subr.mxu0 0.0
    %894 = vmatpush2.msra.mxu0 0.0
    %895 = vmatprep.subr.mxu0 0.0
    %896 = vmatpush2.msra.mxu0 0.0
    %897 = vmatprep.subr.mxu0 0.0
    %898 = vmatpush2.msra.mxu0 0.0
    %899 = vmatprep.subr.mxu0 0.0
    %900 = vmatpush2.msra.mxu0 0.0
    %901 = vmatprep.subr.mxu0 0.0
    %902 = vmatpush2.msra.mxu0 0.0
    %903 = vmatprep.subr.mxu0 0.0
    %904 = vmatpush2.msra.mxu0 0.0
    %905 = vmatprep.subr.mxu0 0.0
    %906 = vmatpush2.msra.mxu0 0.0
    %907 = vmatprep.mubr.f32.mxu0 0.0
    %908 = vmatmul.mubr.f32.gmra.mxu0 %v832
    %v909 = vpop.f32.mrf.mxu0
    %v910 = vadd.f32 %v829, %v909
    %v911 = vpop.f32.mrf.mxu0
    %912 = vmatprep.mubr.f32.mxu0 0.0
    %913 = vmatmul.mubr.f32.gmra.mxu0 %v835
    %v914 = vpop.f32.mrf.mxu0
    %v915 = vadd.f32 %v829, %v914
    %v916 = vpop.f32.mrf.mxu0
    %917 = vmatprep.mubr.f32.mxu0 0.0
    %918 = vmatmul.mubr.f32.gmra.mxu0 %v838
    %v919 = vpop.f32.mrf.mxu0
    %v920 = vadd.f32 %v829, %v919
    %v921 = vpop.f32.mrf.mxu0
    %922 = vmatprep.mubr.f32.mxu0 0.0
    %923 = vmatmul.mubr.f32.gmra.mxu0 %v841
    %v924 = vpop.f32.mrf.mxu0
    %v925 = vadd.f32 %v829, %v924
    %v926 = vpop.f32.mrf.mxu0
    %927 = vdwg.mxu0
    %v928 = vxor.u32 %v910, 2147483648
    %v929 = vxor.u32 %v915, 2147483648
    %v930 = vxor.u32 %v920, 2147483648
    %v931 = vxor.u32 %v925, 2147483648
    %v932 = vmul.f32 %v928, 1.442695
    %v933 = vpow.pop %v932
    %v934 = vmul.f32 %v929, 1.442695
    %v935 = vpow.pop %v934
    %v936 = vmul.f32 %v930, 1.442695
    %v937 = vpow.pop %v936
    %v938 = vmul.f32 %v931, 1.442695
    %v939 = vpow.pop %v938
    %v940 = vadd.f32 %v933, 1.0
    %v941 = vadd.f32 %v935, 1.0
    %v942 = vadd.f32 %v937, 1.0
    %v943 = vadd.f32 %v939, 1.0
    %v944 = vrcp.pop %v940
    %v945 = vmul.f32 1.0, %v944
    %v946 = vrcp.pop %v941
    %v947 = vmul.f32 1.0, %v946
    %v948 = vrcp.pop %v942
    %v949 = vmul.f32 1.0, %v948
    %v950 = vrcp.pop %v943
    %v951 = vmul.f32 1.0, %v950
    %vm952 = vcmask 64512
    %953 = vst.msk [vmem:[%s11] sm:$0xff] %vm952, %v945
    %954 = vst.msk [vmem:[%s11 + $0x8] sm:$0xff] %vm952, %v947
    %955 = vst.msk [vmem:[%s11 + $0x10] sm:$0xff] %vm952, %v949
    %956 = vst.msk [vmem:[%s11 + $0x18] sm:$0xff] %vm952, %v951
    // Predicated region
    $region58: #{tpu_custom_call.1} parent=1 // pred_check
      _
    $region59: #{tpu_custom_call.1} parent=1 // pred_check_branch
      %958 = sbr.rel (0) target = $region61
    $region60: #{tpu_custom_call.1} parent=1 // pred_region
      _
    $region61: #{tpu_custom_call.1} parent=1 // pred_fallthru
      _
    // Predicated region
    $region62: #{tpu_custom_call.1} parent=1 // pred_check
      _
    $region63: #{tpu_custom_call.1} parent=1 // pred_check_branch
      %960 = sbr.rel (0) target = $region65
    $region64: #{tpu_custom_call.1} parent=1 // pred_region
      _
    $region65: #{tpu_custom_call.1} parent=1 // pred_fallthru
      _
    %961 = vsyncpa [#allocation3], 1
    %962 = vsyncpa [#allocation5], 1

</llo_original>
